<compile_context>
chip_gen: v7x
topology: tpu7x:2x2x1
jax: 0.10.0
libtpu: 0.0.40
codegen_flags: <defaults>
</compile_context>

<pallas_src>
import functools
import math

import jax
import jax.numpy as jnp
import numpy as np
from jax.experimental import pallas as pl
from jax.experimental.pallas import tpu as pltpu

BN_EPS = 1e-5  # PyTorch BatchNorm2d default eps (eval mode, default running stats)


# ----------------------------- in-kernel helpers ---------------------------- #

def _shifted_taps(x, masks, W, roll_like_jnp):
    """The 9 shifted (+ border-masked) copies of a flattened (C, P) image.

    Tap order is ky-major (k = ky*3 + kx, spatial offset (ky-1, kx-1)), i.e. it
    matches an HWIO 3x3 kernel reshaped to (9, ...).  Shifts are lane rolls
    (XLU work; pixels live on the lane axis); masks[k] zeroes output pixels for
    which tap k falls outside the image (top/bottom rows and the left/right
    row wrap of the flattened layout).
    """
    P = x.shape[-1]
    taps = []
    k = 0
    for ry in (-1, 0, 1):
        for rx in (-1, 0, 1):
            d = ry * W + rx
            if d == 0:
                t = x
            else:
                shift = (-d) % P if roll_like_jnp else d % P
                t = pltpu.roll(x, shift, axis=1)
            if masks[k] is not None:
                t = t * masks[k]
            taps.append(t)
            k += 1
    return taps


def _conv3x3(x, w_ref, b, masks, W, roll_like_jnp):
    """Full 3x3 conv (stride 1, pad 1) + bias as 9 shifted MXU matmuls.

    x: (Cin, P), w_ref[k]: (Cout, Cin), b: (Cout, 1)  ->  (Cout, P).
    """
    taps = _shifted_taps(x, masks, W, roll_like_jnp)
    acc = jnp.dot(w_ref[0], taps[0], preferred_element_type=jnp.float32)
    for k in range(1, 9):
        acc = acc + jnp.dot(w_ref[k], taps[k], preferred_element_type=jnp.float32)
    return acc + b


def _dw3x3(x, wc_ref, base, masks, W, roll_like_jnp):
    """Depthwise 3x3 (stride 1, pad 1) as 9 shifted VPU multiply-accumulates.

    x: (C, P), wc_ref[base + k]: (C, 1) per-channel tap weight  ->  (C, P).
    """
    taps = _shifted_taps(x, masks, W, roll_like_jnp)
    acc = taps[0] * wc_ref[base + 0]
    for k in range(1, 9):
        acc = acc + taps[k] * wc_ref[base + k]
    return acc


# --------------------------------- kernel ----------------------------------- #

def _ghost_net_kernel(x_ref, mask_ref,
                      wst_ref, bst_ref, wgc_ref, bgc_ref,
                      w1p_ref, w1c_ref, w2pa_ref, w2pb_ref, w2c_ref,
                      wsa_ref, wsb_ref, wsf_ref, bs_ref,
                      wout_ref, bout_ref, o_ref,
                      *, W, L, I1, I2, F, Cg, roll_like_jnp):
    # Load the 8 border masks once; the centre tap (k=4) needs no mask.
    masks = [None if k == 4 else mask_ref[k] for k in range(9)]

    x_in = x_ref[...]                                                  # (Cin, P)

    # start_conv -> h, ghost_conv -> x  (3x3, stride 1, pad 1, + bias).
    h = _conv3x3(x_in, wst_ref, bst_ref[...], masks, W, roll_like_jnp)  # (Cout, P)
    x = _conv3x3(h, wgc_ref, bgc_ref[...], masks, W, roll_like_jnp)     # (Cg,  P)

    # Ghost bottleneck + spectral 1x1 + outer skip; everything stays in VMEM.
    for l in range(L):
        # GhostModule 1 (relu=True): primary 1x1 -> cheap depthwise 3x3.
        prim1 = jnp.maximum(
            jnp.dot(w1p_ref[l], x, preferred_element_type=jnp.float32), 0.0)
        cheap1 = jnp.maximum(
            _dw3x3(prim1, w1c_ref, l * 9, masks, W, roll_like_jnp), 0.0)

        # GhostModule 2 (relu=False).  g1 = [prim1; cheap1[:F-I1]] is never
        # concatenated: the following matmul is split over the two halves.
        prim2 = jnp.dot(w2pa_ref[l], prim1, preferred_element_type=jnp.float32)
        if F - I1 > 0:
            prim2 = prim2 + jnp.dot(w2pb_ref[l], cheap1[:F - I1, :],
                                    preferred_element_type=jnp.float32)
        cheap2 = _dw3x3(prim2, w2c_ref, l * 9, masks, W, roll_like_jnp)

        # x_new = Ws @ (g2 + x) + bs + x   with g2 = [prim2; cheap2[:Cg-I2]];
        # the bottleneck identity shortcut and the outer residual are fused.
        y = jnp.dot(wsa_ref[l], prim2, preferred_element_type=jnp.float32)
        if Cg - I2 > 0:
            y = y + jnp.dot(wsb_ref[l], cheap2[:Cg - I2, :],
                            preferred_element_type=jnp.float32)
        y = y + jnp.dot(wsf_ref[l], x, preferred_element_type=jnp.float32)
        x = y + bs_ref[l] + x

    out = jnp.dot(wout_ref[...], x, preferred_element_type=jnp.float32)
    o_ref[...] = (out + bout_ref[...] + h).astype(o_ref.dtype)


# ------------------------------ host-side prep ------------------------------ #

def _roll_shifts_like_jnp():
    """One-time probe of pltpu.roll's rotation direction (call OUTSIDE jit).

    The tap shifts assume jnp.roll semantics (out[i] = x[(i - shift) % n]); a
    1-element rotate of an iota disambiguates the convention so the kernel is
    correct either way.
    """
    def probe(x_ref, o_ref):
        o_ref[...] = pltpu.roll(x_ref[...], 1, axis=1)

    x = jax.lax.broadcasted_iota(jnp.float32, (8, 128), 1)
    y = pl.pallas_call(
        probe, out_shape=jax.ShapeDtypeStruct((8, 128), jnp.float32))(x)
    return bool(np.asarray(y)[0, 0] == 127.0)


def _prepare_constants(params, H, W):
    """Re-layout the (tiny) weights for the channels-on-sublanes kernel and
    build the 3x3 border masks; everything returned stays resident in VMEM."""
    P = H * W

    # Border masks for the 9 taps (1.0 where the tap stays inside the image).
    pix = np.arange(P)
    row, col = pix // W, pix % W
    m = np.ones((9, 1, P), np.float32)
    k = 0
    for ry in (-1, 0, 1):
        for rx in (-1, 0, 1):
            valid = ((row + ry >= 0) & (row + ry < H) &
                     (col + rx >= 0) & (col + rx < W))
            m[k, 0, :] = valid.astype(np.float32)
            k += 1
    masks = jnp.asarray(m)

    def c3(w):           # HWIO (3,3,Cin,Cout) -> (9, Cout, Cin)
        return jnp.transpose(w, (0, 1, 3, 2)).reshape(9, w.shape[3], w.shape[2])

    def colv(b):         # (C,) -> (C, 1)
        return jnp.asarray(b, jnp.float32).reshape(-1, 1)

    g1_0 = params['ghost_layers'][0]['ghost1']
    g2_0 = params['ghost_layers'][0]['ghost2']
    I1 = g1_0['primary_w'].shape[1]
    I2 = g2_0['primary_w'].shape[1]
    F = g1_0['oup']
    Cg = g2_0['oup']
    L = len(params['ghost_layers'])
    assert F - I1 > 0 and Cg - I2 > 0, "GhostModule needs >= 2 output channels"

    w1p, w1c, w2pa, w2pb, w2c = [], [], [], [], []
    wsa, wsb, wsf, bs = [], [], [], []
    for p_gl, (sw, sb) in zip(params['ghost_layers'], params['spectral']):
        g1, g2 = p_gl['ghost1'], p_gl['ghost2']
        w1p.append(g1['primary_w'].T)                           # (I1, Cg)
        w1c.append(g1['cheap_w'].reshape(9, I1)[..., None])     # (9, I1, 1)
        w2 = g2['primary_w']                                    # (F, I2)
        w2pa.append(w2[:I1, :].T)                               # (I2, I1)
        w2pb.append(w2[I1:F, :].T)                              # (I2, F-I1)
        w2c.append(g2['cheap_w'].reshape(9, I2)[..., None])     # (9, I2, 1)
        wsa.append(sw[:I2, :].T)                                # (Cg, I2)
        wsb.append(sw[I2:Cg, :].T)                              # (Cg, Cg-I2)
        wsf.append(sw.T)                                        # (Cg, Cg)
        bs.append(sb.reshape(Cg, 1))

    consts = [
        masks,
        c3(params['start_w']), colv(params['start_b']),
        c3(params['ghostconv_w']), colv(params['ghostconv_b']),
        jnp.stack(w1p, 0),                 # (L, I1, Cg)
        jnp.concatenate(w1c, 0),           # (L*9, I1, 1)
        jnp.stack(w2pa, 0),                # (L, I2, I1)
        jnp.stack(w2pb, 0),                # (L, I2, F-I1)
        jnp.concatenate(w2c, 0),           # (L*9, I2, 1)
        jnp.stack(wsa, 0),                 # (L, Cg, I2)
        jnp.stack(wsb, 0),                 # (L, Cg, Cg-I2)
        jnp.stack(wsf, 0),                 # (L, Cg, Cg)
        jnp.stack(bs, 0),                  # (L, Cg, 1)
        params['out_w'].T,                 # (Cout, Cg)
        colv(params['out_b']),             # (Cout, 1)
    ]
    dims = dict(L=L, I1=I1, I2=I2, F=F, Cg=Cg)
    return consts, dims


def ghost_reconst_forward(x_nchw, params, *, roll_like_jnp=True):
    N, Cin, H, W = x_nchw.shape
    P = H * W
    consts, dims = _prepare_constants(params, H, W)
    Cout = params['out_w'].shape[1]

    x = x_nchw.reshape(N, Cin, P).astype(jnp.float32)   # NCHW -> (N, C, P), pure reshape

    def resident(a):
        zeros = (0,) * a.ndim
        return pl.BlockSpec(a.shape, lambda n, z=zeros: z)

    kernel = functools.partial(
        _ghost_net_kernel, W=W, roll_like_jnp=roll_like_jnp, **dims)

    out = pl.pallas_call(
        kernel,
        out_shape=jax.ShapeDtypeStruct((N, Cout, P), jnp.float32),
        grid=(N,),
        in_specs=[pl.BlockSpec((None, Cin, P), lambda n: (n, 0, 0))]
                + [resident(a) for a in consts],
        out_specs=pl.BlockSpec((None, Cout, P), lambda n: (n, 0, 0)),
        compiler_params=pltpu.CompilerParams(
            dimension_semantics=("parallel",),     # image axis -> both TCs on v7x
            vmem_limit_bytes=32 * 1024 * 1024,     # tiny footprint; safe on v5e..v7x
        ),
    )(x, *consts)
    return out.reshape(N, Cout, H, W)                    # (N, C, P) -> NCHW


# ------------------------------- parameters --------------------------------- #

def init_params(key, input_ch, output_ch, feature_num, layer_num):
    ghost_out = output_ch + 1 if output_ch % 2 != 0 else output_ch
    bn_scale = 1.0 / math.sqrt(1.0 + BN_EPS)  # eval-mode BN with default stats, folded
    keys = jax.random.split(key, 6 + 8 * layer_num)
    it = iter(keys)

    def nrm(shape, scale=0.1):
        return scale * jax.random.normal(next(it), shape, jnp.float32)

    params = dict(
        start_w=nrm((3, 3, input_ch, output_ch)),
        start_b=nrm((output_ch,)),
        ghostconv_w=nrm((3, 3, output_ch, ghost_out)),
        ghostconv_b=nrm((ghost_out,)),
        out_w=nrm((ghost_out, output_ch)),
        out_b=nrm((output_ch,)),
        ghost_layers=[],
        spectral=[],
    )
    init1 = math.ceil(feature_num / 2)   # GhostModule ratio=2
    init2 = math.ceil(ghost_out / 2)
    for _ in range(layer_num):
        g1 = dict(primary_w=bn_scale * nrm((ghost_out, init1)),
                  cheap_w=bn_scale * nrm((3, 3, init1)),
                  oup=feature_num)
        g2 = dict(primary_w=bn_scale * nrm((feature_num, init2)),
                  cheap_w=bn_scale * nrm((3, 3, init2)),
                  oup=ghost_out)
        params['ghost_layers'].append(dict(ghost1=g1, ghost2=g2))
        params['spectral'].append((nrm((ghost_out, ghost_out)), nrm((ghost_out,))))
    return params


# ------------------------- pure-JAX reference check ------------------------- #

def ref_forward(x_nchw, params):
    x = jnp.transpose(x_nchw, (0, 2, 3, 1))

    def c3(x, w, b):
        y = jax.lax.conv_general_dilated(x, w, (1, 1), 'SAME',
                                         dimension_numbers=('NHWC', 'HWIO', 'NHWC'))
        return y + b

    def c1(x, w, b):
        return jnp.einsum('nhwc,cd->nhwd', x, w) + b

    def dw(x, w):
        C = x.shape[-1]
        return jax.lax.conv_general_dilated(x, w.reshape(3, 3, 1, C), (1, 1), 'SAME',
                                            feature_group_count=C,
                                            dimension_numbers=('NHWC', 'HWIO', 'NHWC'))

    def gm(x, p, relu):
        prim = jnp.einsum('nhwc,cd->nhwd', x, p['primary_w'])
        if relu:
            prim = jnp.maximum(prim, 0.0)
        cheap = dw(prim, p['cheap_w'])
        if relu:
            cheap = jnp.maximum(cheap, 0.0)
        return jnp.concatenate([prim, cheap], -1)[..., :p['oup']]

    h = c3(x, params['start_w'], params['start_b'])
    x = c3(h, params['ghostconv_w'], params['ghostconv_b'])
    for p_gl, (sw, sb) in zip(params['ghost_layers'], params['spectral']):
        sc = x
        g = gm(x, p_gl['ghost1'], True)
        g = gm(g, p_gl['ghost2'], False)
        g = g + x
        x = c1(g, sw, sb) + sc
    out = c1(x, params['out_w'], params['out_b']) + h
    return jnp.transpose(out, (0, 3, 1, 2))


if __name__ == "__main__":
    key = jax.random.PRNGKey(0)
    kx, kp = jax.random.split(key)

    N, input_ch, H, W = 2, 4, 16, 16
    output_ch, feature_num, layer_num = 4, 8, 3   # small synthetic config

    x = jax.random.normal(kx, (N, input_ch, H, W), jnp.float32)
    params = init_params(kp, input_ch, output_ch, feature_num, layer_num)

    roll_like_jnp = _roll_shifts_like_jnp()       # one-time probe, outside jit

    fwd = jax.jit(lambda xx: ghost_reconst_forward(xx, params,
                                                   roll_like_jnp=roll_like_jnp))
    out = jax.block_until_ready(fwd(x))

    assert out.shape == (N, output_ch, H, W)
    ref = ref_forward(x, params)
    np.testing.assert_allclose(np.asarray(out), np.asarray(ref), rtol=1e-3, atol=1e-3)

    print("KERNEL_OK")
</pallas_src>

<mosaic_0001>
module attributes {stable_mosaic.version = 11 : i64} {
  func.func @probe(%arg0: memref<8x128xf32, #tpu.memory_space<vmem>>, %arg1: memref<8x128xf32, #tpu.memory_space<vmem>>) attributes {dimension_semantics = [], scalar_prefetch = 0 : i64, scratch_operands = 0 : i64, tpu.core_type = #tpu.core_type<tc>} {
    %c0 = arith.constant 0 : index
    %c0_0 = arith.constant 0 : index
    %0 = vector.load %arg0[%c0, %c0_0] : memref<8x128xf32, #tpu.memory_space<vmem>>, vector<8x128xf32>
    %c1_i32 = arith.constant 1 : i32
    %1 = tpu.dynamic_rotate %0 by %c1_i32 dim 1 : vector<8x128xf32>, i32 -> vector<8x128xf32>
    %c0_1 = arith.constant 0 : index
    %c0_2 = arith.constant 0 : index
    %2 = vector.load %arg1[%c0_1, %c0_2] : memref<8x128xf32, #tpu.memory_space<vmem>>, vector<8x128xf32>
    tpu.vector_store %arg1[%c0_1, %c0_2], %1 {strides = array<i32>} : memref<8x128xf32, #tpu.memory_space<vmem>>, vector<8x128xf32>,
    return
  }
}

</mosaic_0001>

<llo_original>
// kernel: tpu_custom_call.1
$region0: #{tpu_custom_call.1}
  #allocation0 [shape = 'u32[]', space=smem, size = 0x4, offset = 0x4, fixed_abs, tag = 'smem constant byte address 0x4 - core index']
  #allocation1 [shape = 'u32[144,128]{1,0:T(1,128)}', space=vmem, size = 0x12000, scoped, tag = 'internal scratch']
  %s0 = inlined_call_operand.hbm [shape: f32[8,128], index: 0, kind: input, shape index: {}]
  %s1 = inlined_call_operand.hbm [shape: f32[8,128], index: 1, kind: output, shape index: {}]
  %s2 = sld [smem:[#allocation0]]
  $region18: #{tpu_custom_call.1} parent=0
    _
  %s4 = ssub.s32 1, %s2
  %s5 = scalar_select 0, %s4, %s2
  $region1: #{tpu_custom_call.1} parent=0
    #allocation2 [shape = 'u8[4096]{0}', space=vmem, size = 0x1000, scoped, tag = 'input window, operand 0, single buffered']
    #allocation3 [shape = 's32[1]{0}', space=sflag, size = 0x4, scoped, tag = 'scoped memory for tpu_custom_call.1']
    #allocation4 [shape = 's32[1]{0}', space=sflag, size = 0x4, scoped, tag = 'scoped memory for tpu_custom_call.1']
    #allocation5 [shape = 'u8[4096]{0}', space=vmem, size = 0x1000, scoped, tag = 'output window, operand 0, single buffered']
    %6 = vsyncpa [#allocation3], 0
    %7 = vsyncpa [#allocation4], 0
    // Predicated region
    $region2: #{tpu_custom_call.1} parent=1 // pred_check
      _
    $region3: #{tpu_custom_call.1} parent=1 // pred_check_branch
      %9 = sbr.rel (0) target = $region5
    $region4: #{tpu_custom_call.1} parent=1 // pred_region
      %s11 = ssub.s32 128, 128
      %12 = vsyncadd [#allocation3], %s11
      %s14 = sshll.u32 [#allocation2], 4
      %s15 = int_to_ptr.vmem [resolvable:$true] %s14
      %17 = dma.hbm_to_vmem [thread:$0]  %s0, 128, %s15, [#allocation3]
    $region5: #{tpu_custom_call.1} parent=1 // pred_fallthru
      _
    // Predicated region
    $region6: #{tpu_custom_call.1} parent=1 // pred_check
      _
    $region7: #{tpu_custom_call.1} parent=1 // pred_check_branch
      %19 = sbr.rel (0) target = $region9
    $region8: #{tpu_custom_call.1} parent=1 // pred_region
      %20 = dma.done [#allocation3], 128
    $region9: #{tpu_custom_call.1} parent=1 // pred_fallthru
      _
    %v21 = vld [vmem:[#allocation2] sm:$0xff]
    %22 = vrot.lane.b32.xlu0 %v21, 1
    %v23 = vpop.permute.xlu0 %22
    %24 = vst [vmem:[#allocation5] sm:$0xff] %v23
    // Predicated region
    $region10: #{tpu_custom_call.1} parent=1 // pred_check
      _
    $region11: #{tpu_custom_call.1} parent=1 // pred_check_branch
      %26 = sbr.rel (0) target = $region13
    $region12: #{tpu_custom_call.1} parent=1 // pred_region
      %s28 = ssub.s32 128, 128
      %29 = vsyncadd [#allocation4], %s28
      %s31 = sshll.u32 [#allocation5], 4
      %s32 = int_to_ptr.vmem [resolvable:$true] %s31
      %34 = dma.vmem_to_hbm [thread:$0]  %s32, 128, %s1, [#allocation4]
    $region13: #{tpu_custom_call.1} parent=1 // pred_fallthru
      _
    // Predicated region
    $region14: #{tpu_custom_call.1} parent=1 // pred_check
      _
    $region15: #{tpu_custom_call.1} parent=1 // pred_check_branch
      %36 = sbr.rel (0) target = $region17
    $region16: #{tpu_custom_call.1} parent=1 // pred_region
      %37 = dma.done [#allocation4], 128
    $region17: #{tpu_custom_call.1} parent=1 // pred_fallthru
      _
    %38 = vsyncpa [#allocation3], 1
    %39 = vsyncpa [#allocation4], 1

</llo_original>
